<compile_context>
chip_gen: v7x
topology: tpu7x:2x2x1
jax: 0.10.0
libtpu: 0.0.40
codegen_flags: <defaults>
</compile_context>

<pallas_src>
import jax
import jax.numpy as jnp
from jax.experimental import pallas as pl
from jax.experimental.pallas import tpu as pltpu


def _mlp_kernel(x_ref, w1_ref, b1_ref, w2_ref, b2_ref, o_ref):
    """One batch tile: out = relu(x @ W1 + b1) @ W2 + b2 (fully fused in VMEM)."""
    h = jnp.dot(x_ref[...], w1_ref[...], preferred_element_type=jnp.float32)
    h = jnp.maximum(h + b1_ref[...].astype(jnp.float32), 0.0)
    out = jnp.dot(h.astype(w2_ref.dtype), w2_ref[...],
                  preferred_element_type=jnp.float32)
    o_ref[...] = (out + b2_ref[...].astype(jnp.float32)).astype(o_ref.dtype)


def _pick_tile_b(batch, d_in, d_out, itemsize, requested):
    """Largest multiple-of-8 batch tile that keeps streamed buffers small."""
    batch8 = ((batch + 7) // 8) * 8
    tile_b = min(requested, batch8)
    # Keep double-buffered x + out tiles well under the default scoped-VMEM
    # budget (leave room for the resident weights/biases and the f32 hidden).
    budget_bytes = 8 << 20  # 8 MiB for the streamed tiles
    per_row = 2 * (d_in + d_out) * itemsize  # double-buffered in + out
    max_rows = max(8, budget_bytes // max(per_row, 1))
    tile_b = min(tile_b, max_rows)
    return max(8, (tile_b // 8) * 8)


def message_function_mlp(x, w1, b1, w2, b2, *, tile_b=512):
    """Pallas equivalent of MessageFunctionMLP.forward.

    Args:
      x:  (..., raw_message_dimension) raw messages.
      w1: (raw_message_dimension, raw_message_dimension // 2) first-layer weight.
      b1: (raw_message_dimension // 2,) first-layer bias.
      w2: (raw_message_dimension // 2, message_dimension) second-layer weight.
      b2: (message_dimension,) second-layer bias.
    Returns:
      (..., message_dimension) messages.
    """
    d_in, d_hidden = w1.shape
    d_out = w2.shape[-1]
    assert x.shape[-1] == d_in
    assert w2.shape[0] == d_hidden
    assert b1.shape == (d_hidden,) and b2.shape == (d_out,)

    lead_shape = x.shape[:-1]
    x2 = x.reshape(-1, d_in)
    batch = x2.shape[0]

    tile_b = _pick_tile_b(batch, d_in, d_out, x2.dtype.itemsize, tile_b)
    batch_pad = pl.cdiv(batch, tile_b) * tile_b
    if batch_pad != batch:
        x2 = jnp.pad(x2, ((0, batch_pad - batch), (0, 0)))

    # Biases as (1, D) so they broadcast over the batch tile inside the kernel.
    b1_2d = b1.reshape(1, d_hidden)
    b2_2d = b2.reshape(1, d_out)

    grid = (batch_pad // tile_b,)
    out = pl.pallas_call(
        _mlp_kernel,
        grid=grid,
        in_specs=[
            pl.BlockSpec((tile_b, d_in), lambda i: (i, 0)),     # x tile (streamed)
            pl.BlockSpec((d_in, d_hidden), lambda i: (0, 0)),   # W1 (resident)
            pl.BlockSpec((1, d_hidden), lambda i: (0, 0)),      # b1 (resident)
            pl.BlockSpec((d_hidden, d_out), lambda i: (0, 0)),  # W2 (resident)
            pl.BlockSpec((1, d_out), lambda i: (0, 0)),         # b2 (resident)
        ],
        out_specs=pl.BlockSpec((tile_b, d_out), lambda i: (i, 0)),
        out_shape=jax.ShapeDtypeStruct((batch_pad, d_out), x.dtype),
        compiler_params=pltpu.CompilerParams(
            dimension_semantics=("parallel",),
        ),
    )(x2, w1, b1_2d, w2, b2_2d)

    if batch_pad != batch:
        out = out[:batch]
    return out.reshape(*lead_shape, d_out)


if __name__ == "__main__":
    # raw_message_dimension = 128 -> hidden = 64 -> message_dimension = 128.
    raw_dim, msg_dim = 128, 128
    hidden = raw_dim // 2
    B = 8

    key = jax.random.PRNGKey(0)
    kx, kw1, kb1, kw2, kb2 = jax.random.split(key, 5)
    x = jax.random.normal(kx, (B, raw_dim), dtype=jnp.float32)
    # nn.Linear init scale ~ 1/sqrt(fan_in); exact init scheme is irrelevant
    # for the forward-pass check.
    w1 = jax.random.normal(kw1, (raw_dim, hidden), dtype=jnp.float32) / jnp.sqrt(raw_dim)
    b1 = jax.random.normal(kb1, (hidden,), dtype=jnp.float32) * 0.01
    w2 = jax.random.normal(kw2, (hidden, msg_dim), dtype=jnp.float32) / jnp.sqrt(hidden)
    b2 = jax.random.normal(kb2, (msg_dim,), dtype=jnp.float32) * 0.01

    out = message_function_mlp(x, w1, b1, w2, b2)
    out = jax.block_until_ready(out)

    # Pure-JAX reference (same semantics as the torch nn.Sequential).
    ref = jnp.maximum(x @ w1 + b1, 0.0) @ w2 + b2

    assert out.shape == (B, msg_dim), out.shape
    assert out.dtype == jnp.float32
    assert jnp.allclose(out, ref, rtol=2e-3, atol=2e-3), float(
        jnp.max(jnp.abs(out - ref)))

    print("KERNEL_OK")
</pallas_src>

<mosaic_0001>
module attributes {stable_mosaic.version = 11 : i64} {
  func.func @_mlp_kernel(%arg0: i32, %arg1: memref<8x128xf32, #tpu.memory_space<vmem>>, %arg2: memref<128x64xf32, #tpu.memory_space<vmem>>, %arg3: memref<1x64xf32, #tpu.memory_space<vmem>>, %arg4: memref<64x128xf32, #tpu.memory_space<vmem>>, %arg5: memref<1x128xf32, #tpu.memory_space<vmem>>, %arg6: memref<8x128xf32, #tpu.memory_space<vmem>>) attributes {dimension_semantics = [#tpu.dimension_semantics<parallel>], iteration_bounds = array<i64: 1>, scalar_prefetch = 0 : i64, scratch_operands = 0 : i64, tpu.core_type = #tpu.core_type<tc>, window_params = [{transform_indices = @transform_0, window_bounds = array<i64: 8, 128>}, {pipeline_mode = #tpu.pipeline_mode<synchronous>, transform_indices = @transform_1, window_bounds = array<i64: 128, 64>}, {pipeline_mode = #tpu.pipeline_mode<synchronous>, transform_indices = @transform_2, window_bounds = array<i64: 1, 64>}, {pipeline_mode = #tpu.pipeline_mode<synchronous>, transform_indices = @transform_3, window_bounds = array<i64: 64, 128>}, {pipeline_mode = #tpu.pipeline_mode<synchronous>, transform_indices = @transform_4, window_bounds = array<i64: 1, 128>}, {transform_indices = @transform_5, window_bounds = array<i64: 8, 128>}]} {
    %c0 = arith.constant 0 : index
    %c0_0 = arith.constant 0 : index
    %0 = vector.load %arg1[%c0, %c0_0] : memref<8x128xf32, #tpu.memory_space<vmem>>, vector<8x128xf32>
    %c0_1 = arith.constant 0 : index
    %c0_2 = arith.constant 0 : index
    %1 = vector.load %arg2[%c0_1, %c0_2] : memref<128x64xf32, #tpu.memory_space<vmem>>, vector<128x64xf32>
    %cst = arith.constant dense<0.000000e+00> : vector<8x64xf32>
    %2 = tpu.matmul %0, %1, %cst {dimension_numbers = #tpu.dot_dimension_numbers<[1], [0], [0], [1], [0, 0, 1, 1], [], []>} : vector<8x128xf32>, vector<128x64xf32>, vector<8x64xf32> -> vector<8x64xf32>
    %c0_3 = arith.constant 0 : index
    %c0_4 = arith.constant 0 : index
    %3 = vector.load %arg3[%c0_3, %c0_4] : memref<1x64xf32, #tpu.memory_space<vmem>>, vector<1x64xf32>
    %4 = vector.broadcast %3 : vector<1x64xf32> to vector<8x64xf32>
    %5 = arith.addf %2, %4 : vector<8x64xf32>
    %cst_5 = arith.constant 0.000000e+00 : f32
    %6 = vector.broadcast %cst_5 : f32 to vector<8x64xf32>
    %7 = arith.maximumf %5, %6 : vector<8x64xf32>
    %c0_6 = arith.constant 0 : index
    %c0_7 = arith.constant 0 : index
    %8 = vector.load %arg4[%c0_6, %c0_7] : memref<64x128xf32, #tpu.memory_space<vmem>>, vector<64x128xf32>
    %cst_8 = arith.constant dense<0.000000e+00> : vector<8x128xf32>
    %9 = tpu.matmul %7, %8, %cst_8 {dimension_numbers = #tpu.dot_dimension_numbers<[1], [0], [0], [1], [0, 0, 1, 1], [], []>} : vector<8x64xf32>, vector<64x128xf32>, vector<8x128xf32> -> vector<8x128xf32>
    %c0_9 = arith.constant 0 : index
    %c0_10 = arith.constant 0 : index
    %10 = vector.load %arg5[%c0_9, %c0_10] : memref<1x128xf32, #tpu.memory_space<vmem>>, vector<1x128xf32>
    %11 = vector.broadcast %10 : vector<1x128xf32> to vector<8x128xf32>
    %12 = arith.addf %9, %11 : vector<8x128xf32>
    %c0_11 = arith.constant 0 : index
    %c0_12 = arith.constant 0 : index
    %13 = vector.load %arg6[%c0_11, %c0_12] : memref<8x128xf32, #tpu.memory_space<vmem>>, vector<8x128xf32>
    tpu.vector_store %arg6[%c0_11, %c0_12], %12 {strides = array<i32>} : memref<8x128xf32, #tpu.memory_space<vmem>>, vector<8x128xf32>,
    return
  }
  func.func @transform_0(%arg0: i32) -> (i32, i32) {
    %c0_i32 = arith.constant 0 : i32
    %c0_i32_0 = arith.constant 0 : i32
    return %arg0, %c0_i32 : i32, i32
  }
  func.func @transform_1(%arg0: i32) -> (i32, i32) {
    %c0_i32 = arith.constant 0 : i32
    %c0_i32_0 = arith.constant 0 : i32
    %c0_i32_1 = arith.constant 0 : i32
    return %c0_i32, %c0_i32_0 : i32, i32
  }
  func.func @transform_2(%arg0: i32) -> (i32, i32) {
    %c0_i32 = arith.constant 0 : i32
    %c0_i32_0 = arith.constant 0 : i32
    %c0_i32_1 = arith.constant 0 : i32
    return %c0_i32, %c0_i32_0 : i32, i32
  }
  func.func @transform_3(%arg0: i32) -> (i32, i32) {
    %c0_i32 = arith.constant 0 : i32
    %c0_i32_0 = arith.constant 0 : i32
    %c0_i32_1 = arith.constant 0 : i32
    return %c0_i32, %c0_i32_0 : i32, i32
  }
  func.func @transform_4(%arg0: i32) -> (i32, i32) {
    %c0_i32 = arith.constant 0 : i32
    %c0_i32_0 = arith.constant 0 : i32
    %c0_i32_1 = arith.constant 0 : i32
    return %c0_i32, %c0_i32_0 : i32, i32
  }
  func.func @transform_5(%arg0: i32) -> (i32, i32) {
    %c0_i32 = arith.constant 0 : i32
    %c0_i32_0 = arith.constant 0 : i32
    return %arg0, %c0_i32 : i32, i32
  }
}

</mosaic_0001>

<llo_original>
// kernel: tpu_custom_call.1
$region0: #{tpu_custom_call.1}
  #allocation0 [shape = 'u32[]', space=smem, size = 0x4, offset = 0x4, fixed_abs, tag = 'smem constant byte address 0x4 - core index']
  #allocation1 [shape = 'u32[144,128]{1,0:T(1,128)}', space=vmem, size = 0x12000, scoped, tag = 'internal scratch']
  %s0 = inlined_call_operand.vmem [shape: f32[8,128], index: 0, kind: input, shape index: {}]
  %s1 = inlined_call_operand.vmem [shape: f32[128,64], index: 1, kind: input, shape index: {}]
  %s2 = inlined_call_operand.vmem [shape: f32[1,64], index: 2, kind: input, shape index: {}]
  %s3 = inlined_call_operand.vmem [shape: f32[64,128], index: 3, kind: input, shape index: {}]
  %s4 = inlined_call_operand.vmem [shape: f32[1,128], index: 4, kind: input, shape index: {}]
  %s5 = inlined_call_operand.hbm [shape: f32[8,128], index: 5, kind: output, shape index: {}]
  %s6 = sld [smem:[#allocation0]]
  $region30: #{tpu_custom_call.1} parent=0
    _
  %s8 = ssub.s32 1, %s6
  %s9 = scalar_select 0, %s8, %s6
  $region1: #{tpu_custom_call.1} parent=0
    #allocation2 [shape = 'u8[4096]{0}', space=vmem, size = 0x1000, scoped, tag = 'output window, operand 0, single buffered']
    #allocation3 [shape = 's32[1]{0}', space=sflag, size = 0x4, scoped, tag = 'scoped memory for tpu_custom_call.1']
    %10 = vsyncpa [#allocation3], 0
    // Predicated region
    $region2: #{tpu_custom_call.1} parent=1 // pred_check
      _
    $region3: #{tpu_custom_call.1} parent=1 // pred_check_branch
      %12 = sbr.rel (0) target = $region5
    $region4: #{tpu_custom_call.1} parent=1 // pred_region
      _
    $region5: #{tpu_custom_call.1} parent=1 // pred_fallthru
      _
    // Predicated region
    $region6: #{tpu_custom_call.1} parent=1 // pred_check
      _
    $region7: #{tpu_custom_call.1} parent=1 // pred_check_branch
      %14 = sbr.rel (0) target = $region9
    $region8: #{tpu_custom_call.1} parent=1 // pred_region
      _
    $region9: #{tpu_custom_call.1} parent=1 // pred_fallthru
      _
    // Predicated region
    $region10: #{tpu_custom_call.1} parent=1 // pred_check
      _
    $region11: #{tpu_custom_call.1} parent=1 // pred_check_branch
      %16 = sbr.rel (0) target = $region13
    $region12: #{tpu_custom_call.1} parent=1 // pred_region
      _
    $region13: #{tpu_custom_call.1} parent=1 // pred_fallthru
      _
    // Predicated region
    $region14: #{tpu_custom_call.1} parent=1 // pred_check
      _
    $region15: #{tpu_custom_call.1} parent=1 // pred_check_branch
      %18 = sbr.rel (0) target = $region17
    $region16: #{tpu_custom_call.1} parent=1 // pred_region
      _
    $region17: #{tpu_custom_call.1} parent=1 // pred_fallthru
      _
    // Predicated region
    $region18: #{tpu_custom_call.1} parent=1 // pred_check
      _
    $region19: #{tpu_custom_call.1} parent=1 // pred_check_branch
      %20 = sbr.rel (0) target = $region21
    $region20: #{tpu_custom_call.1} parent=1 // pred_region
      _
    $region21: #{tpu_custom_call.1} parent=1 // pred_fallthru
      _
    %v21 = vld [vmem:[%s0] sm:$0xff]
    %v22 = vld [vmem:[%s1] sm:$0xff]
    %v23 = vld [vmem:[%s1 + $0x8] sm:$0xff]
    %v24 = vld [vmem:[%s1 + $0x10] sm:$0xff]
    %v25 = vld [vmem:[%s1 + $0x18] sm:$0xff]
    %v26 = vld [vmem:[%s1 + $0x20] sm:$0xff]
    %v27 = vld [vmem:[%s1 + $0x28] sm:$0xff]
    %v28 = vld [vmem:[%s1 + $0x30] sm:$0xff]
    %v29 = vld [vmem:[%s1 + $0x38] sm:$0xff]
    %v30 = vld [vmem:[%s1 + $0x40] sm:$0xff]
    %v31 = vld [vmem:[%s1 + $0x48] sm:$0xff]
    %v32 = vld [vmem:[%s1 + $0x50] sm:$0xff]
    %v33 = vld [vmem:[%s1 + $0x58] sm:$0xff]
    %v34 = vld [vmem:[%s1 + $0x60] sm:$0xff]
    %v35 = vld [vmem:[%s1 + $0x68] sm:$0xff]
    %v36 = vld [vmem:[%s1 + $0x70] sm:$0xff]
    %v37 = vld [vmem:[%s1 + $0x78] sm:$0xff]
    %v38 = vld [vmem:[%s2] sm:$0x1]
    %v40 = vlaneseq
    %v41 = vshrl.u32 %v40, 7
    %v42 = vsub.s32 0, %v41
    %v43 = vrot.slane %v38, %v42
    %45 = vmatprep.subr.mxu0 0.0
    %46 = vmatpush1.msra.mxu0 %v22
    %47 = vmatprep.subr.mxu0 0.0
    %48 = vmatpush1.msra.mxu0 %v23
    %49 = vmatprep.subr.mxu0 0.0
    %50 = vmatpush1.msra.mxu0 %v24
    %51 = vmatprep.subr.mxu0 0.0
    %52 = vmatpush1.msra.mxu0 %v25
    %53 = vmatprep.subr.mxu0 0.0
    %54 = vmatpush1.msra.mxu0 %v26
    %55 = vmatprep.subr.mxu0 0.0
    %56 = vmatpush1.msra.mxu0 %v27
    %57 = vmatprep.subr.mxu0 0.0
    %58 = vmatpush1.msra.mxu0 %v28
    %59 = vmatprep.subr.mxu0 0.0
    %60 = vmatpush1.msra.mxu0 %v29
    %61 = vmatprep.subr.mxu0 0.0
    %62 = vmatpush1.msra.mxu0 %v30
    %63 = vmatprep.subr.mxu0 0.0
    %64 = vmatpush1.msra.mxu0 %v31
    %65 = vmatprep.subr.mxu0 0.0
    %66 = vmatpush1.msra.mxu0 %v32
    %67 = vmatprep.subr.mxu0 0.0
    %68 = vmatpush1.msra.mxu0 %v33
    %69 = vmatprep.subr.mxu0 0.0
    %70 = vmatpush1.msra.mxu0 %v34
    %71 = vmatprep.subr.mxu0 0.0
    %72 = vmatpush1.msra.mxu0 %v35
    %73 = vmatprep.subr.mxu0 0.0
    %74 = vmatpush1.msra.mxu0 %v36
    %75 = vmatprep.subr.mxu0 0.0
    %76 = vmatpush1.msra.mxu0 %v37
    %77 = vmatprep.subr.mxu0 0.0
    %78 = vmatpush1.msra.mxu0 0.0
    %79 = vmatprep.subr.mxu0 0.0
    %80 = vmatpush1.msra.mxu0 0.0
    %81 = vmatprep.subr.mxu0 0.0
    %82 = vmatpush1.msra.mxu0 0.0
    %83 = vmatprep.subr.mxu0 0.0
    %84 = vmatpush1.msra.mxu0 0.0
    %85 = vmatprep.subr.mxu0 0.0
    %86 = vmatpush1.msra.mxu0 0.0
    %87 = vmatprep.subr.mxu0 0.0
    %88 = vmatpush1.msra.mxu0 0.0
    %89 = vmatprep.subr.mxu0 0.0
    %90 = vmatpush1.msra.mxu0 0.0
    %91 = vmatprep.subr.mxu0 0.0
    %92 = vmatpush1.msra.mxu0 0.0
    %93 = vmatprep.subr.mxu0 0.0
    %94 = vmatpush1.msra.mxu0 0.0
    %95 = vmatprep.subr.mxu0 0.0
    %96 = vmatpush1.msra.mxu0 0.0
    %97 = vmatprep.subr.mxu0 0.0
    %98 = vmatpush1.msra.mxu0 0.0
    %99 = vmatprep.subr.mxu0 0.0
    %100 = vmatpush1.msra.mxu0 0.0
    %101 = vmatprep.subr.mxu0 0.0
    %102 = vmatpush1.msra.mxu0 0.0
    %103 = vmatprep.subr.mxu0 0.0
    %104 = vmatpush1.msra.mxu0 0.0
    %105 = vmatprep.subr.mxu0 0.0
    %106 = vmatpush1.msra.mxu0 0.0
    %107 = vmatprep.subr.mxu0 0.0
    %108 = vmatpush1.msra.mxu0 0.0
    %109 = vmatprep.mubr.f32.mxu0 0.0
    %110 = vmatmul.mubr.f32.gmra.mrb[0].mxu0 %v21
    %v111 = vpop.f32.mrb[0].mxu0
    %v112 = vadd.f32 %v43, %v111
    %v113 = vpop.f32.mrb[0].mxu0
    %114 = vdwg.mxu0
    %v115 = vmax.f32 %v112, 0.0
    %v116 = vld [vmem:[%s3] sm:$0xff]
    %v117 = vld [vmem:[%s3 + $0x8] sm:$0xff]
    %v118 = vld [vmem:[%s3 + $0x10] sm:$0xff]
    %v119 = vld [vmem:[%s3 + $0x18] sm:$0xff]
    %v120 = vld [vmem:[%s3 + $0x20] sm:$0xff]
    %v121 = vld [vmem:[%s3 + $0x28] sm:$0xff]
    %v122 = vld [vmem:[%s3 + $0x30] sm:$0xff]
    %v123 = vld [vmem:[%s3 + $0x38] sm:$0xff]
    %v124 = vld [vmem:[%s4] sm:$0x1]
    %v126 = vlaneseq
    %v127 = vshrl.u32 %v126, 7
    %v128 = vsub.s32 0, %v127
    %v129 = vrot.slane %v124, %v128
    %vm131 = vcmask 523264
    %v133 = vsel %vm131, %v115, 0
    %135 = vmatprep.subr.mxu0 0.0
    %136 = vmatpush1.msra.mxu0 %v116
    %137 = vmatprep.subr.mxu0 0.0
    %138 = vmatpush1.msra.mxu0 %v117
    %139 = vmatprep.subr.mxu0 0.0
    %140 = vmatpush1.msra.mxu0 %v118
    %141 = vmatprep.subr.mxu0 0.0
    %142 = vmatpush1.msra.mxu0 %v119
    %143 = vmatprep.subr.mxu0 0.0
    %144 = vmatpush1.msra.mxu0 %v120
    %145 = vmatprep.subr.mxu0 0.0
    %146 = vmatpush1.msra.mxu0 %v121
    %147 = vmatprep.subr.mxu0 0.0
    %148 = vmatpush1.msra.mxu0 %v122
    %149 = vmatprep.subr.mxu0 0.0
    %150 = vmatpush1.msra.mxu0 %v123
    %151 = vmatprep.subr.mxu0 0.0
    %152 = vmatpush1.msra.mxu0 0.0
    %153 = vmatprep.subr.mxu0 0.0
    %154 = vmatpush1.msra.mxu0 0.0
    %155 = vmatprep.subr.mxu0 0.0
    %156 = vmatpush1.msra.mxu0 0.0
    %157 = vmatprep.subr.mxu0 0.0
    %158 = vmatpush1.msra.mxu0 0.0
    %159 = vmatprep.subr.mxu0 0.0
    %160 = vmatpush1.msra.mxu0 0.0
    %161 = vmatprep.subr.mxu0 0.0
    %162 = vmatpush1.msra.mxu0 0.0
    %163 = vmatprep.subr.mxu0 0.0
    %164 = vmatpush1.msra.mxu0 0.0
    %165 = vmatprep.subr.mxu0 0.0
    %166 = vmatpush1.msra.mxu0 0.0
    %167 = vmatprep.subr.mxu0 0.0
    %168 = vmatpush1.msra.mxu0 0.0
    %169 = vmatprep.subr.mxu0 0.0
    %170 = vmatpush1.msra.mxu0 0.0
    %171 = vmatprep.subr.mxu0 0.0
    %172 = vmatpush1.msra.mxu0 0.0
    %173 = vmatprep.subr.mxu0 0.0
    %174 = vmatpush1.msra.mxu0 0.0
    %175 = vmatprep.subr.mxu0 0.0
    %176 = vmatpush1.msra.mxu0 0.0
    %177 = vmatprep.subr.mxu0 0.0
    %178 = vmatpush1.msra.mxu0 0.0
    %179 = vmatprep.subr.mxu0 0.0
    %180 = vmatpush1.msra.mxu0 0.0
    %181 = vmatprep.subr.mxu0 0.0
    %182 = vmatpush1.msra.mxu0 0.0
    %183 = vmatprep.subr.mxu0 0.0
    %184 = vmatpush1.msra.mxu0 0.0
    %185 = vmatprep.subr.mxu0 0.0
    %186 = vmatpush1.msra.mxu0 0.0
    %187 = vmatprep.subr.mxu0 0.0
    %188 = vmatpush1.msra.mxu0 0.0
    %189 = vmatprep.subr.mxu0 0.0
    %190 = vmatpush1.msra.mxu0 0.0
    %191 = vmatprep.subr.mxu0 0.0
    %192 = vmatpush1.msra.mxu0 0.0
    %193 = vmatprep.subr.mxu0 0.0
    %194 = vmatpush1.msra.mxu0 0.0
    %195 = vmatprep.subr.mxu0 0.0
    %196 = vmatpush1.msra.mxu0 0.0
    %197 = vmatprep.subr.mxu0 0.0
    %198 = vmatpush1.msra.mxu0 0.0
    %199 = vmatprep.mubr.f32.mxu0 0.0
    %200 = vmatmul.mubr.f32.gmra.mrb[0].mxu0 %v133
    %v201 = vpop.f32.mrb[0].mxu0
    %v202 = vadd.f32 %v129, %v201
    %v203 = vpop.f32.mrb[0].mxu0
    %204 = vdwg.mxu0
    %205 = vst [vmem:[#allocation2] sm:$0xff] %v202
    // Predicated region
    $region22: #{tpu_custom_call.1} parent=1 // pred_check
      _
    $region23: #{tpu_custom_call.1} parent=1 // pred_check_branch
      %207 = sbr.rel (0) target = $region25
    $region24: #{tpu_custom_call.1} parent=1 // pred_region
      %s209 = ssub.s32 128, 128
      %210 = vsyncadd [#allocation3], %s209
      %s212 = sshll.u32 [#allocation2], 4
      %s213 = int_to_ptr.vmem [resolvable:$true] %s212
      %215 = dma.vmem_to_hbm [thread:$0]  %s213, 128, %s5, [#allocation3]
    $region25: #{tpu_custom_call.1} parent=1 // pred_fallthru
      _
    // Predicated region
    $region26: #{tpu_custom_call.1} parent=1 // pred_check
      _
    $region27: #{tpu_custom_call.1} parent=1 // pred_check_branch
      %217 = sbr.rel (0) target = $region29
    $region28: #{tpu_custom_call.1} parent=1 // pred_region
      %218 = dma.done [#allocation3], 128
    $region29: #{tpu_custom_call.1} parent=1 // pred_fallthru
      _
    %219 = vsyncpa [#allocation3], 1

</llo_original>
